<compile_context>
chip_gen: v7x
topology: tpu7x:2x2x1
jax: 0.10.0
libtpu: 0.0.40
codegen_flags: <defaults>
</compile_context>

<pallas_src>
import jax
import jax.numpy as jnp
from jax import lax
from jax.experimental import pallas as pl
from jax.experimental.pallas import tpu as pltpu


def rnn_encoder_kernel(x_ref, w_comb_ref, b_comb_ref, w_hh_ref, out_ref,
                       gx_scr):
    T, B, H = out_ref.shape

    # One batched matmul for the entire non-recurrent x-path:
    # (T*B, IN) @ (IN, 4H) + (1, 4H)  -> stored once in VMEM scratch.
    gx_scr[...] = (
        jnp.dot(x_ref[...], w_comb_ref[...], preferred_element_type=jnp.float32)
        + b_comb_ref[...])

    # Hoist loop-invariant weight load out of the recurrence.
    w_hh = w_hh_ref[...]  # (H, 4H)

    def step(t, carry):
        h, c = carry
        row = pl.multiple_of(t * B, 8)
        gates = gx_scr[pl.ds(row, B), :] + jnp.dot(
            h, w_hh, preferred_element_type=jnp.float32)  # (B, 4H)

        # Full-vreg transcendentals (one sigmoid push + one tanh push), then
        # slice the i/f/o and g gates (PyTorch gate order: i, f, g, o).
        sig_all = jax.nn.sigmoid(gates)
        tanh_all = jnp.tanh(gates)
        i_g = sig_all[:, 0 * H:1 * H]
        f_g = sig_all[:, 1 * H:2 * H]
        g_g = tanh_all[:, 2 * H:3 * H]
        o_g = sig_all[:, 3 * H:4 * H]

        c_new = f_g * c + i_g * g_g
        h_new = o_g * jnp.tanh(c_new)

        out_ref[t] = h_new.astype(out_ref.dtype)  # VMEM-resident output block
        return (h_new, c_new)

    h0 = jnp.zeros((B, H), jnp.float32)
    c0 = jnp.zeros((B, H), jnp.float32)
    lax.fori_loop(0, T, step, (h0, c0), unroll=True)

    # TODO(synk): training-mode dropout (p>0) not implemented; p=0 / eval is
    # identity, which matches the reference config.


def rnn_encoder_pallas(x, w_emb, b_emb, w_ih, w_hh, b_lstm, hidden):
    T, B, IN = x.shape
    H = hidden

    # Fold the embedding Linear into the LSTM input projection (exact algebra):
    #   (x @ W_emb + b_emb) @ W_ih + b_lstm == x @ (W_emb @ W_ih)
    #                                          + (b_emb @ W_ih + b_lstm)
    w_comb = w_emb @ w_ih                 # (IN, 4H)
    b_comb = b_emb @ w_ih + b_lstm        # (1, 4H)
    x2d = x.reshape(T * B, IN)            # free row-major reshape in XLA

    return pl.pallas_call(
        rnn_encoder_kernel,
        out_shape=jax.ShapeDtypeStruct((T, B, H), jnp.float32),
        grid_spec=pltpu.PrefetchScalarGridSpec(
            num_scalar_prefetch=0,
            grid=(1,),
            in_specs=[
                pl.BlockSpec((T * B, IN), lambda i: (0, 0)),      # x (flat)
                pl.BlockSpec(w_comb.shape, lambda i: (0, 0)),     # (IN, 4H)
                pl.BlockSpec(b_comb.shape, lambda i: (0, 0)),     # (1, 4H)
                pl.BlockSpec(w_hh.shape, lambda i: (0, 0)),       # (H, 4H)
            ],
            out_specs=pl.BlockSpec((T, B, H), lambda i: (0, 0, 0)),
            scratch_shapes=[
                pltpu.VMEM((T * B, 4 * H), jnp.float32),  # gates_x
            ],
        ),
        compiler_params=pltpu.CompilerParams(
            dimension_semantics=("arbitrary",)),
    )(x2d, w_comb, b_comb, w_hh)


def rnn_encoder_reference(x, w_emb, b_emb, w_ih, w_hh, b_lstm, hidden):
    """Pure-JAX reference (PyTorch LSTM gate equations / order i,f,g,o)."""
    T, B, _ = x.shape
    H = hidden
    emb = jnp.einsum('tbi,ie->tbe', x, w_emb) + b_emb  # dropout = identity

    def step(carry, e_t):
        h, c = carry
        gates = e_t @ w_ih + h @ w_hh + b_lstm
        i_g = jax.nn.sigmoid(gates[:, 0 * H:1 * H])
        f_g = jax.nn.sigmoid(gates[:, 1 * H:2 * H])
        g_g = jnp.tanh(gates[:, 2 * H:3 * H])
        o_g = jax.nn.sigmoid(gates[:, 3 * H:4 * H])
        c_new = f_g * c + i_g * g_g
        h_new = o_g * jnp.tanh(c_new)
        return (h_new, c_new), h_new

    init = (jnp.zeros((B, H), jnp.float32), jnp.zeros((B, H), jnp.float32))
    _, out = jax.lax.scan(step, init, emb)
    return out


if __name__ == "__main__":
    # Small config consistent with the module's forward.
    VOCAB_SIZE = 16
    IN_DIM = VOCAB_SIZE * 2      # 32
    EMB_DIM = 32
    HIDDEN = 32
    T, B = 8, 8

    key = jax.random.PRNGKey(0)
    k_x, k_we, k_be, k_wih, k_whh, k_bih, k_bhh = jax.random.split(key, 7)

    x = jax.random.normal(k_x, (T, B, IN_DIM), dtype=jnp.float32)
    # nn.Linear(IN_DIM, EMB_DIM): weight (EMB_DIM, IN_DIM) -> pass transposed.
    w_emb = jax.random.normal(k_we, (IN_DIM, EMB_DIM), jnp.float32) * 0.1
    b_emb = jax.random.normal(k_be, (1, EMB_DIM), jnp.float32) * 0.1
    # nn.LSTM: weight_ih_l0 (4H, E) -> pass transposed (E, 4H); same for hh.
    w_ih = jax.random.normal(k_wih, (EMB_DIM, 4 * HIDDEN), jnp.float32) * 0.1
    w_hh = jax.random.normal(k_whh, (HIDDEN, 4 * HIDDEN), jnp.float32) * 0.1
    b_ih = jax.random.normal(k_bih, (1, 4 * HIDDEN), jnp.float32) * 0.1
    b_hh = jax.random.normal(k_bhh, (1, 4 * HIDDEN), jnp.float32) * 0.1
    b_lstm = b_ih + b_hh  # PyTorch adds both biases

    out = rnn_encoder_pallas(x, w_emb, b_emb, w_ih, w_hh, b_lstm, HIDDEN)
    out = jax.block_until_ready(out)

    ref = rnn_encoder_reference(x, w_emb, b_emb, w_ih, w_hh, b_lstm, HIDDEN)
    assert out.shape == (T, B, HIDDEN)
    assert jnp.allclose(out, ref, atol=1e-5, rtol=1e-5), "mismatch vs reference"

    print("KERNEL_OK")
</pallas_src>

<mosaic_0001>
module attributes {stable_mosaic.version = 11 : i64} {
  func.func @rnn_encoder_kernel(%arg0: i32, %arg1: memref<64x32xf32, #tpu.memory_space<vmem>>, %arg2: memref<32x128xf32, #tpu.memory_space<vmem>>, %arg3: memref<1x128xf32, #tpu.memory_space<vmem>>, %arg4: memref<32x128xf32, #tpu.memory_space<vmem>>, %arg5: memref<8x8x32xf32, #tpu.memory_space<vmem>>, %arg6: memref<64x128xf32, #tpu.memory_space<vmem>>) attributes {dimension_semantics = [#tpu.dimension_semantics<arbitrary>], iteration_bounds = array<i64: 1>, scalar_prefetch = 0 : i64, scratch_operands = 1 : i64, tpu.core_type = #tpu.core_type<tc>, window_params = [{pipeline_mode = #tpu.pipeline_mode<synchronous>, transform_indices = @transform_0, window_bounds = array<i64: 64, 32>}, {pipeline_mode = #tpu.pipeline_mode<synchronous>, transform_indices = @transform_1, window_bounds = array<i64: 32, 128>}, {pipeline_mode = #tpu.pipeline_mode<synchronous>, transform_indices = @transform_2, window_bounds = array<i64: 1, 128>}, {pipeline_mode = #tpu.pipeline_mode<synchronous>, transform_indices = @transform_3, window_bounds = array<i64: 32, 128>}, {pipeline_mode = #tpu.pipeline_mode<synchronous>, transform_indices = @transform_4, window_bounds = array<i64: 8, 8, 32>}]} {
    %c0 = arith.constant 0 : index
    %c0_0 = arith.constant 0 : index
    %0 = vector.load %arg1[%c0, %c0_0] : memref<64x32xf32, #tpu.memory_space<vmem>>, vector<64x32xf32>
    %c0_1 = arith.constant 0 : index
    %c0_2 = arith.constant 0 : index
    %1 = vector.load %arg2[%c0_1, %c0_2] : memref<32x128xf32, #tpu.memory_space<vmem>>, vector<32x128xf32>
    %cst = arith.constant dense<0.000000e+00> : vector<64x128xf32>
    %2 = tpu.matmul %0, %1, %cst {dimension_numbers = #tpu.dot_dimension_numbers<[1], [0], [0], [1], [0, 0, 1, 1], [], []>} : vector<64x32xf32>, vector<32x128xf32>, vector<64x128xf32> -> vector<64x128xf32>
    %c0_3 = arith.constant 0 : index
    %c0_4 = arith.constant 0 : index
    %3 = vector.load %arg3[%c0_3, %c0_4] : memref<1x128xf32, #tpu.memory_space<vmem>>, vector<1x128xf32>
    %4 = vector.broadcast %3 : vector<1x128xf32> to vector<64x128xf32>
    %5 = arith.addf %2, %4 : vector<64x128xf32>
    %c0_5 = arith.constant 0 : index
    %c0_6 = arith.constant 0 : index
    %6 = vector.load %arg6[%c0_5, %c0_6] : memref<64x128xf32, #tpu.memory_space<vmem>>, vector<64x128xf32>
    tpu.vector_store %arg6[%c0_5, %c0_6], %5 {strides = array<i32>} : memref<64x128xf32, #tpu.memory_space<vmem>>, vector<64x128xf32>,
    %c0_7 = arith.constant 0 : index
    %c0_8 = arith.constant 0 : index
    %7 = vector.load %arg4[%c0_7, %c0_8] : memref<32x128xf32, #tpu.memory_space<vmem>>, vector<32x128xf32>
    %cst_9 = arith.constant 0.000000e+00 : f32
    %8 = vector.broadcast %cst_9 : f32 to vector<8x32xf32>
    %cst_10 = arith.constant 0.000000e+00 : f32
    %9 = vector.broadcast %cst_10 : f32 to vector<8x32xf32>
    %c0_i32 = arith.constant 0 : i32
    %c8_i32 = arith.constant 8 : i32
    %10 = arith.muli %c0_i32, %c8_i32 : i32
    %11 = tpu.assume_multiple %10, 8 : i32
    %12 = arith.index_cast %11 : i32 to index
    %c0_11 = arith.constant 0 : index
    %13 = vector.load %arg6[%12, %c0_11] : memref<64x128xf32, #tpu.memory_space<vmem>>, vector<8x128xf32>
    %cst_12 = arith.constant dense<0.000000e+00> : vector<8x128xf32>
    %14 = tpu.matmul %8, %7, %cst_12 {dimension_numbers = #tpu.dot_dimension_numbers<[1], [0], [0], [1], [0, 0, 1, 1], [], []>} : vector<8x32xf32>, vector<32x128xf32>, vector<8x128xf32> -> vector<8x128xf32>
    %15 = arith.addf %13, %14 : vector<8x128xf32>
    %16 = arith.negf %15 : vector<8x128xf32>
    %17 = math.exp %16 : vector<8x128xf32>
    %cst_13 = arith.constant 1.000000e+00 : f32
    %18 = vector.broadcast %cst_13 : f32 to vector<8x128xf32>
    %19 = arith.addf %18, %17 : vector<8x128xf32>
    %20 = arith.divf %18, %19 : vector<8x128xf32>
    %21 = math.tanh %15 : vector<8x128xf32>
    %22 = vector.extract_strided_slice %20 {offsets = [0, 0], sizes = [8, 32], strides = [1, 1]} : vector<8x128xf32> to vector<8x32xf32>
    %23 = vector.extract_strided_slice %20 {offsets = [0, 32], sizes = [8, 32], strides = [1, 1]} : vector<8x128xf32> to vector<8x32xf32>
    %24 = vector.extract_strided_slice %21 {offsets = [0, 64], sizes = [8, 32], strides = [1, 1]} : vector<8x128xf32> to vector<8x32xf32>
    %25 = vector.extract_strided_slice %20 {offsets = [0, 96], sizes = [8, 32], strides = [1, 1]} : vector<8x128xf32> to vector<8x32xf32>
    %26 = arith.mulf %23, %9 : vector<8x32xf32>
    %27 = arith.mulf %22, %24 : vector<8x32xf32>
    %28 = arith.addf %26, %27 : vector<8x32xf32>
    %29 = math.tanh %28 : vector<8x32xf32>
    %30 = arith.mulf %25, %29 : vector<8x32xf32>
    %31 = arith.index_cast %c0_i32 : i32 to index
    %c0_14 = arith.constant 0 : index
    %c0_15 = arith.constant 0 : index
    %32 = vector.load %arg5[%31, %c0_14, %c0_15] : memref<8x8x32xf32, #tpu.memory_space<vmem>>, vector<1x8x32xf32>
    %33 = vector.shape_cast %32 : vector<1x8x32xf32> to vector<8x32xf32>
    %34 = vector.shape_cast %30 : vector<8x32xf32> to vector<1x8x32xf32>
    tpu.vector_store %arg5[%31, %c0_14, %c0_15], %34 {strides = array<i32>} : memref<8x8x32xf32, #tpu.memory_space<vmem>>, vector<1x8x32xf32>,
    %c1_i32 = arith.constant 1 : i32
    %c8_i32_16 = arith.constant 8 : i32
    %35 = arith.muli %c1_i32, %c8_i32_16 : i32
    %36 = tpu.assume_multiple %35, 8 : i32
    %37 = arith.index_cast %36 : i32 to index
    %c0_17 = arith.constant 0 : index
    %38 = vector.load %arg6[%37, %c0_17] : memref<64x128xf32, #tpu.memory_space<vmem>>, vector<8x128xf32>
    %cst_18 = arith.constant dense<0.000000e+00> : vector<8x128xf32>
    %39 = tpu.matmul %30, %7, %cst_18 {dimension_numbers = #tpu.dot_dimension_numbers<[1], [0], [0], [1], [0, 0, 1, 1], [], []>} : vector<8x32xf32>, vector<32x128xf32>, vector<8x128xf32> -> vector<8x128xf32>
    %40 = arith.addf %38, %39 : vector<8x128xf32>
    %41 = arith.negf %40 : vector<8x128xf32>
    %42 = math.exp %41 : vector<8x128xf32>
    %cst_19 = arith.constant 1.000000e+00 : f32
    %43 = vector.broadcast %cst_19 : f32 to vector<8x128xf32>
    %44 = arith.addf %43, %42 : vector<8x128xf32>
    %45 = arith.divf %43, %44 : vector<8x128xf32>
    %46 = math.tanh %40 : vector<8x128xf32>
    %47 = vector.extract_strided_slice %45 {offsets = [0, 0], sizes = [8, 32], strides = [1, 1]} : vector<8x128xf32> to vector<8x32xf32>
    %48 = vector.extract_strided_slice %45 {offsets = [0, 32], sizes = [8, 32], strides = [1, 1]} : vector<8x128xf32> to vector<8x32xf32>
    %49 = vector.extract_strided_slice %46 {offsets = [0, 64], sizes = [8, 32], strides = [1, 1]} : vector<8x128xf32> to vector<8x32xf32>
    %50 = vector.extract_strided_slice %45 {offsets = [0, 96], sizes = [8, 32], strides = [1, 1]} : vector<8x128xf32> to vector<8x32xf32>
    %51 = arith.mulf %48, %28 : vector<8x32xf32>
    %52 = arith.mulf %47, %49 : vector<8x32xf32>
    %53 = arith.addf %51, %52 : vector<8x32xf32>
    %54 = math.tanh %53 : vector<8x32xf32>
    %55 = arith.mulf %50, %54 : vector<8x32xf32>
    %56 = arith.index_cast %c1_i32 : i32 to index
    %c0_20 = arith.constant 0 : index
    %c0_21 = arith.constant 0 : index
    %57 = vector.load %arg5[%56, %c0_20, %c0_21] : memref<8x8x32xf32, #tpu.memory_space<vmem>>, vector<1x8x32xf32>
    %58 = vector.shape_cast %57 : vector<1x8x32xf32> to vector<8x32xf32>
    %59 = vector.shape_cast %55 : vector<8x32xf32> to vector<1x8x32xf32>
    tpu.vector_store %arg5[%56, %c0_20, %c0_21], %59 {strides = array<i32>} : memref<8x8x32xf32, #tpu.memory_space<vmem>>, vector<1x8x32xf32>,
    %c2_i32 = arith.constant 2 : i32
    %c8_i32_22 = arith.constant 8 : i32
    %60 = arith.muli %c2_i32, %c8_i32_22 : i32
    %61 = tpu.assume_multiple %60, 8 : i32
    %62 = arith.index_cast %61 : i32 to index
    %c0_23 = arith.constant 0 : index
    %63 = vector.load %arg6[%62, %c0_23] : memref<64x128xf32, #tpu.memory_space<vmem>>, vector<8x128xf32>
    %cst_24 = arith.constant dense<0.000000e+00> : vector<8x128xf32>
    %64 = tpu.matmul %55, %7, %cst_24 {dimension_numbers = #tpu.dot_dimension_numbers<[1], [0], [0], [1], [0, 0, 1, 1], [], []>} : vector<8x32xf32>, vector<32x128xf32>, vector<8x128xf32> -> vector<8x128xf32>
    %65 = arith.addf %63, %64 : vector<8x128xf32>
    %66 = arith.negf %65 : vector<8x128xf32>
    %67 = math.exp %66 : vector<8x128xf32>
    %cst_25 = arith.constant 1.000000e+00 : f32
    %68 = vector.broadcast %cst_25 : f32 to vector<8x128xf32>
    %69 = arith.addf %68, %67 : vector<8x128xf32>
    %70 = arith.divf %68, %69 : vector<8x128xf32>
    %71 = math.tanh %65 : vector<8x128xf32>
    %72 = vector.extract_strided_slice %70 {offsets = [0, 0], sizes = [8, 32], strides = [1, 1]} : vector<8x128xf32> to vector<8x32xf32>
    %73 = vector.extract_strided_slice %70 {offsets = [0, 32], sizes = [8, 32], strides = [1, 1]} : vector<8x128xf32> to vector<8x32xf32>
    %74 = vector.extract_strided_slice %71 {offsets = [0, 64], sizes = [8, 32], strides = [1, 1]} : vector<8x128xf32> to vector<8x32xf32>
    %75 = vector.extract_strided_slice %70 {offsets = [0, 96], sizes = [8, 32], strides = [1, 1]} : vector<8x128xf32> to vector<8x32xf32>
    %76 = arith.mulf %73, %53 : vector<8x32xf32>
    %77 = arith.mulf %72, %74 : vector<8x32xf32>
    %78 = arith.addf %76, %77 : vector<8x32xf32>
    %79 = math.tanh %78 : vector<8x32xf32>
    %80 = arith.mulf %75, %79 : vector<8x32xf32>
    %81 = arith.index_cast %c2_i32 : i32 to index
    %c0_26 = arith.constant 0 : index
    %c0_27 = arith.constant 0 : index
    %82 = vector.load %arg5[%81, %c0_26, %c0_27] : memref<8x8x32xf32, #tpu.memory_space<vmem>>, vector<1x8x32xf32>
    %83 = vector.shape_cast %82 : vector<1x8x32xf32> to vector<8x32xf32>
    %84 = vector.shape_cast %80 : vector<8x32xf32> to vector<1x8x32xf32>
    tpu.vector_store %arg5[%81, %c0_26, %c0_27], %84 {strides = array<i32>} : memref<8x8x32xf32, #tpu.memory_space<vmem>>, vector<1x8x32xf32>,
    %c3_i32 = arith.constant 3 : i32
    %c8_i32_28 = arith.constant 8 : i32
    %85 = arith.muli %c3_i32, %c8_i32_28 : i32
    %86 = tpu.assume_multiple %85, 8 : i32
    %87 = arith.index_cast %86 : i32 to index
    %c0_29 = arith.constant 0 : index
    %88 = vector.load %arg6[%87, %c0_29] : memref<64x128xf32, #tpu.memory_space<vmem>>, vector<8x128xf32>
    %cst_30 = arith.constant dense<0.000000e+00> : vector<8x128xf32>
    %89 = tpu.matmul %80, %7, %cst_30 {dimension_numbers = #tpu.dot_dimension_numbers<[1], [0], [0], [1], [0, 0, 1, 1], [], []>} : vector<8x32xf32>, vector<32x128xf32>, vector<8x128xf32> -> vector<8x128xf32>
    %90 = arith.addf %88, %89 : vector<8x128xf32>
    %91 = arith.negf %90 : vector<8x128xf32>
    %92 = math.exp %91 : vector<8x128xf32>
    %cst_31 = arith.constant 1.000000e+00 : f32
    %93 = vector.broadcast %cst_31 : f32 to vector<8x128xf32>
    %94 = arith.addf %93, %92 : vector<8x128xf32>
    %95 = arith.divf %93, %94 : vector<8x128xf32>
    %96 = math.tanh %90 : vector<8x128xf32>
    %97 = vector.extract_strided_slice %95 {offsets = [0, 0], sizes = [8, 32], strides = [1, 1]} : vector<8x128xf32> to vector<8x32xf32>
    %98 = vector.extract_strided_slice %95 {offsets = [0, 32], sizes = [8, 32], strides = [1, 1]} : vector<8x128xf32> to vector<8x32xf32>
    %99 = vector.extract_strided_slice %96 {offsets = [0, 64], sizes = [8, 32], strides = [1, 1]} : vector<8x128xf32> to vector<8x32xf32>
    %100 = vector.extract_strided_slice %95 {offsets = [0, 96], sizes = [8, 32], strides = [1, 1]} : vector<8x128xf32> to vector<8x32xf32>
    %101 = arith.mulf %98, %78 : vector<8x32xf32>
    %102 = arith.mulf %97, %99 : vector<8x32xf32>
    %103 = arith.addf %101, %102 : vector<8x32xf32>
    %104 = math.tanh %103 : vector<8x32xf32>
    %105 = arith.mulf %100, %104 : vector<8x32xf32>
    %106 = arith.index_cast %c3_i32 : i32 to index
    %c0_32 = arith.constant 0 : index
    %c0_33 = arith.constant 0 : index
    %107 = vector.load %arg5[%106, %c0_32, %c0_33] : memref<8x8x32xf32, #tpu.memory_space<vmem>>, vector<1x8x32xf32>
    %108 = vector.shape_cast %107 : vector<1x8x32xf32> to vector<8x32xf32>
    %109 = vector.shape_cast %105 : vector<8x32xf32> to vector<1x8x32xf32>
    tpu.vector_store %arg5[%106, %c0_32, %c0_33], %109 {strides = array<i32>} : memref<8x8x32xf32, #tpu.memory_space<vmem>>, vector<1x8x32xf32>,
    %c4_i32 = arith.constant 4 : i32
    %c8_i32_34 = arith.constant 8 : i32
    %110 = arith.muli %c4_i32, %c8_i32_34 : i32
    %111 = tpu.assume_multiple %110, 8 : i32
    %112 = arith.index_cast %111 : i32 to index
    %c0_35 = arith.constant 0 : index
    %113 = vector.load %arg6[%112, %c0_35] : memref<64x128xf32, #tpu.memory_space<vmem>>, vector<8x128xf32>
    %cst_36 = arith.constant dense<0.000000e+00> : vector<8x128xf32>
    %114 = tpu.matmul %105, %7, %cst_36 {dimension_numbers = #tpu.dot_dimension_numbers<[1], [0], [0], [1], [0, 0, 1, 1], [], []>} : vector<8x32xf32>, vector<32x128xf32>, vector<8x128xf32> -> vector<8x128xf32>
    %115 = arith.addf %113, %114 : vector<8x128xf32>
    %116 = arith.negf %115 : vector<8x128xf32>
    %117 = math.exp %116 : vector<8x128xf32>
    %cst_37 = arith.constant 1.000000e+00 : f32
    %118 = vector.broadcast %cst_37 : f32 to vector<8x128xf32>
    %119 = arith.addf %118, %117 : vector<8x128xf32>
    %120 = arith.divf %118, %119 : vector<8x128xf32>
    %121 = math.tanh %115 : vector<8x128xf32>
    %122 = vector.extract_strided_slice %120 {offsets = [0, 0], sizes = [8, 32], strides = [1, 1]} : vector<8x128xf32> to vector<8x32xf32>
    %123 = vector.extract_strided_slice %120 {offsets = [0, 32], sizes = [8, 32], strides = [1, 1]} : vector<8x128xf32> to vector<8x32xf32>
    %124 = vector.extract_strided_slice %121 {offsets = [0, 64], sizes = [8, 32], strides = [1, 1]} : vector<8x128xf32> to vector<8x32xf32>
    %125 = vector.extract_strided_slice %120 {offsets = [0, 96], sizes = [8, 32], strides = [1, 1]} : vector<8x128xf32> to vector<8x32xf32>
    %126 = arith.mulf %123, %103 : vector<8x32xf32>
    %127 = arith.mulf %122, %124 : vector<8x32xf32>
    %128 = arith.addf %126, %127 : vector<8x32xf32>
    %129 = math.tanh %128 : vector<8x32xf32>
    %130 = arith.mulf %125, %129 : vector<8x32xf32>
    %131 = arith.index_cast %c4_i32 : i32 to index
    %c0_38 = arith.constant 0 : index
    %c0_39 = arith.constant 0 : index
    %132 = vector.load %arg5[%131, %c0_38, %c0_39] : memref<8x8x32xf32, #tpu.memory_space<vmem>>, vector<1x8x32xf32>
    %133 = vector.shape_cast %132 : vector<1x8x32xf32> to vector<8x32xf32>
    %134 = vector.shape_cast %130 : vector<8x32xf32> to vector<1x8x32xf32>
    tpu.vector_store %arg5[%131, %c0_38, %c0_39], %134 {strides = array<i32>} : memref<8x8x32xf32, #tpu.memory_space<vmem>>, vector<1x8x32xf32>,
    %c5_i32 = arith.constant 5 : i32
    %c8_i32_40 = arith.constant 8 : i32
    %135 = arith.muli %c5_i32, %c8_i32_40 : i32
    %136 = tpu.assume_multiple %135, 8 : i32
    %137 = arith.index_cast %136 : i32 to index
    %c0_41 = arith.constant 0 : index
    %138 = vector.load %arg6[%137, %c0_41] : memref<64x128xf32, #tpu.memory_space<vmem>>, vector<8x128xf32>
    %cst_42 = arith.constant dense<0.000000e+00> : vector<8x128xf32>
    %139 = tpu.matmul %130, %7, %cst_42 {dimension_numbers = #tpu.dot_dimension_numbers<[1], [0], [0], [1], [0, 0, 1, 1], [], []>} : vector<8x32xf32>, vector<32x128xf32>, vector<8x128xf32> -> vector<8x128xf32>
    %140 = arith.addf %138, %139 : vector<8x128xf32>
    %141 = arith.negf %140 : vector<8x128xf32>
    %142 = math.exp %141 : vector<8x128xf32>
    %cst_43 = arith.constant 1.000000e+00 : f32
    %143 = vector.broadcast %cst_43 : f32 to vector<8x128xf32>
    %144 = arith.addf %143, %142 : vector<8x128xf32>
    %145 = arith.divf %143, %144 : vector<8x128xf32>
    %146 = math.tanh %140 : vector<8x128xf32>
    %147 = vector.extract_strided_slice %145 {offsets = [0, 0], sizes = [8, 32], strides = [1, 1]} : vector<8x128xf32> to vector<8x32xf32>
    %148 = vector.extract_strided_slice %145 {offsets = [0, 32], sizes = [8, 32], strides = [1, 1]} : vector<8x128xf32> to vector<8x32xf32>
    %149 = vector.extract_strided_slice %146 {offsets = [0, 64], sizes = [8, 32], strides = [1, 1]} : vector<8x128xf32> to vector<8x32xf32>
    %150 = vector.extract_strided_slice %145 {offsets = [0, 96], sizes = [8, 32], strides = [1, 1]} : vector<8x128xf32> to vector<8x32xf32>
    %151 = arith.mulf %148, %128 : vector<8x32xf32>
    %152 = arith.mulf %147, %149 : vector<8x32xf32>
    %153 = arith.addf %151, %152 : vector<8x32xf32>
    %154 = math.tanh %153 : vector<8x32xf32>
    %155 = arith.mulf %150, %154 : vector<8x32xf32>
    %156 = arith.index_cast %c5_i32 : i32 to index
    %c0_44 = arith.constant 0 : index
    %c0_45 = arith.constant 0 : index
    %157 = vector.load %arg5[%156, %c0_44, %c0_45] : memref<8x8x32xf32, #tpu.memory_space<vmem>>, vector<1x8x32xf32>
    %158 = vector.shape_cast %157 : vector<1x8x32xf32> to vector<8x32xf32>
    %159 = vector.shape_cast %155 : vector<8x32xf32> to vector<1x8x32xf32>
    tpu.vector_store %arg5[%156, %c0_44, %c0_45], %159 {strides = array<i32>} : memref<8x8x32xf32, #tpu.memory_space<vmem>>, vector<1x8x32xf32>,
    %c6_i32 = arith.constant 6 : i32
    %c8_i32_46 = arith.constant 8 : i32
    %160 = arith.muli %c6_i32, %c8_i32_46 : i32
    %161 = tpu.assume_multiple %160, 8 : i32
    %162 = arith.index_cast %161 : i32 to index
    %c0_47 = arith.constant 0 : index
    %163 = vector.load %arg6[%162, %c0_47] : memref<64x128xf32, #tpu.memory_space<vmem>>, vector<8x128xf32>
    %cst_48 = arith.constant dense<0.000000e+00> : vector<8x128xf32>
    %164 = tpu.matmul %155, %7, %cst_48 {dimension_numbers = #tpu.dot_dimension_numbers<[1], [0], [0], [1], [0, 0, 1, 1], [], []>} : vector<8x32xf32>, vector<32x128xf32>, vector<8x128xf32> -> vector<8x128xf32>
    %165 = arith.addf %163, %164 : vector<8x128xf32>
    %166 = arith.negf %165 : vector<8x128xf32>
    %167 = math.exp %166 : vector<8x128xf32>
    %cst_49 = arith.constant 1.000000e+00 : f32
    %168 = vector.broadcast %cst_49 : f32 to vector<8x128xf32>
    %169 = arith.addf %168, %167 : vector<8x128xf32>
    %170 = arith.divf %168, %169 : vector<8x128xf32>
    %171 = math.tanh %165 : vector<8x128xf32>
    %172 = vector.extract_strided_slice %170 {offsets = [0, 0], sizes = [8, 32], strides = [1, 1]} : vector<8x128xf32> to vector<8x32xf32>
    %173 = vector.extract_strided_slice %170 {offsets = [0, 32], sizes = [8, 32], strides = [1, 1]} : vector<8x128xf32> to vector<8x32xf32>
    %174 = vector.extract_strided_slice %171 {offsets = [0, 64], sizes = [8, 32], strides = [1, 1]} : vector<8x128xf32> to vector<8x32xf32>
    %175 = vector.extract_strided_slice %170 {offsets = [0, 96], sizes = [8, 32], strides = [1, 1]} : vector<8x128xf32> to vector<8x32xf32>
    %176 = arith.mulf %173, %153 : vector<8x32xf32>
    %177 = arith.mulf %172, %174 : vector<8x32xf32>
    %178 = arith.addf %176, %177 : vector<8x32xf32>
    %179 = math.tanh %178 : vector<8x32xf32>
    %180 = arith.mulf %175, %179 : vector<8x32xf32>
    %181 = arith.index_cast %c6_i32 : i32 to index
    %c0_50 = arith.constant 0 : index
    %c0_51 = arith.constant 0 : index
    %182 = vector.load %arg5[%181, %c0_50, %c0_51] : memref<8x8x32xf32, #tpu.memory_space<vmem>>, vector<1x8x32xf32>
    %183 = vector.shape_cast %182 : vector<1x8x32xf32> to vector<8x32xf32>
    %184 = vector.shape_cast %180 : vector<8x32xf32> to vector<1x8x32xf32>
    tpu.vector_store %arg5[%181, %c0_50, %c0_51], %184 {strides = array<i32>} : memref<8x8x32xf32, #tpu.memory_space<vmem>>, vector<1x8x32xf32>,
    %c7_i32 = arith.constant 7 : i32
    %c8_i32_52 = arith.constant 8 : i32
    %185 = arith.muli %c7_i32, %c8_i32_52 : i32
    %186 = tpu.assume_multiple %185, 8 : i32
    %187 = arith.index_cast %186 : i32 to index
    %c0_53 = arith.constant 0 : index
    %188 = vector.load %arg6[%187, %c0_53] : memref<64x128xf32, #tpu.memory_space<vmem>>, vector<8x128xf32>
    %cst_54 = arith.constant dense<0.000000e+00> : vector<8x128xf32>
    %189 = tpu.matmul %180, %7, %cst_54 {dimension_numbers = #tpu.dot_dimension_numbers<[1], [0], [0], [1], [0, 0, 1, 1], [], []>} : vector<8x32xf32>, vector<32x128xf32>, vector<8x128xf32> -> vector<8x128xf32>
    %190 = arith.addf %188, %189 : vector<8x128xf32>
    %191 = arith.negf %190 : vector<8x128xf32>
    %192 = math.exp %191 : vector<8x128xf32>
    %cst_55 = arith.constant 1.000000e+00 : f32
    %193 = vector.broadcast %cst_55 : f32 to vector<8x128xf32>
    %194 = arith.addf %193, %192 : vector<8x128xf32>
    %195 = arith.divf %193, %194 : vector<8x128xf32>
    %196 = math.tanh %190 : vector<8x128xf32>
    %197 = vector.extract_strided_slice %195 {offsets = [0, 0], sizes = [8, 32], strides = [1, 1]} : vector<8x128xf32> to vector<8x32xf32>
    %198 = vector.extract_strided_slice %195 {offsets = [0, 32], sizes = [8, 32], strides = [1, 1]} : vector<8x128xf32> to vector<8x32xf32>
    %199 = vector.extract_strided_slice %196 {offsets = [0, 64], sizes = [8, 32], strides = [1, 1]} : vector<8x128xf32> to vector<8x32xf32>
    %200 = vector.extract_strided_slice %195 {offsets = [0, 96], sizes = [8, 32], strides = [1, 1]} : vector<8x128xf32> to vector<8x32xf32>
    %201 = arith.mulf %198, %178 : vector<8x32xf32>
    %202 = arith.mulf %197, %199 : vector<8x32xf32>
    %203 = arith.addf %201, %202 : vector<8x32xf32>
    %204 = math.tanh %203 : vector<8x32xf32>
    %205 = arith.mulf %200, %204 : vector<8x32xf32>
    %206 = arith.index_cast %c7_i32 : i32 to index
    %c0_56 = arith.constant 0 : index
    %c0_57 = arith.constant 0 : index
    %207 = vector.load %arg5[%206, %c0_56, %c0_57] : memref<8x8x32xf32, #tpu.memory_space<vmem>>, vector<1x8x32xf32>
    %208 = vector.shape_cast %207 : vector<1x8x32xf32> to vector<8x32xf32>
    %209 = vector.shape_cast %205 : vector<8x32xf32> to vector<1x8x32xf32>
    tpu.vector_store %arg5[%206, %c0_56, %c0_57], %209 {strides = array<i32>} : memref<8x8x32xf32, #tpu.memory_space<vmem>>, vector<1x8x32xf32>,
    %c8_i32_58 = arith.constant 8 : i32
    return
  }
  func.func @transform_0(%arg0: i32) -> (i32, i32) {
    %c0_i32 = arith.constant 0 : i32
    %c0_i32_0 = arith.constant 0 : i32
    %c0_i32_1 = arith.constant 0 : i32
    return %c0_i32, %c0_i32_0 : i32, i32
  }
  func.func @transform_1(%arg0: i32) -> (i32, i32) {
    %c0_i32 = arith.constant 0 : i32
    %c0_i32_0 = arith.constant 0 : i32
    %c0_i32_1 = arith.constant 0 : i32
    return %c0_i32, %c0_i32_0 : i32, i32
  }
  func.func @transform_2(%arg0: i32) -> (i32, i32) {
    %c0_i32 = arith.constant 0 : i32
    %c0_i32_0 = arith.constant 0 : i32
    %c0_i32_1 = arith.constant 0 : i32
    return %c0_i32, %c0_i32_0 : i32, i32
  }
  func.func @transform_3(%arg0: i32) -> (i32, i32) {
    %c0_i32 = arith.constant 0 : i32
    %c0_i32_0 = arith.constant 0 : i32
    %c0_i32_1 = arith.constant 0 : i32
    return %c0_i32, %c0_i32_0 : i32, i32
  }
  func.func @transform_4(%arg0: i32) -> (i32, i32, i32) {
    %c0_i32 = arith.constant 0 : i32
    %c0_i32_0 = arith.constant 0 : i32
    %c0_i32_1 = arith.constant 0 : i32
    %c0_i32_2 = arith.constant 0 : i32
    return %c0_i32, %c0_i32_0, %c0_i32_1 : i32, i32, i32
  }
}

</mosaic_0001>

<llo_original>
// kernel: tpu_custom_call.1
$region0: #{tpu_custom_call.1}
  #allocation0 [shape = 'u32[]', space=smem, size = 0x4, offset = 0x4, fixed_abs, tag = 'smem constant byte address 0x4 - core index']
  #allocation1 [shape = 'u32[144,128]{1,0:T(1,128)}', space=vmem, size = 0x12000, scoped, tag = 'internal scratch']
  #allocation2 [shape = 'f32[64,128]{1,0:T(8,128)}', space=vmem, size = 0x8000, scoped, tag = 'scratch operand']
  %s0 = inlined_call_operand.vmem [shape: f32[64,32], index: 0, kind: input, shape index: {}]
  %s1 = inlined_call_operand.vmem [shape: f32[32,128], index: 1, kind: input, shape index: {}]
  %s2 = inlined_call_operand.vmem [shape: f32[1,128], index: 2, kind: input, shape index: {}]
  %s3 = inlined_call_operand.vmem [shape: f32[32,128], index: 3, kind: input, shape index: {}]
  %s4 = inlined_call_operand.hbm [shape: f32[8,8,32], index: 4, kind: output, shape index: {}]
  %s5 = sld [smem:[#allocation0]]
  $region26: #{tpu_custom_call.1} parent=0
    _
  %s7 = ssub.s32 1, %s5
  %s8 = scalar_select 0, %s7, %s5
  $region1: #{tpu_custom_call.1} parent=0
    #allocation3 [shape = 'u8[32768]{0}', space=vmem, size = 0x8000, scoped, tag = 'output window, operand 0, single buffered']
    #allocation4 [shape = 's32[1]{0}', space=sflag, size = 0x4, scoped, tag = 'scoped memory for tpu_custom_call.1']
    %9 = vsyncpa [#allocation4], 0
    // Predicated region
    $region2: #{tpu_custom_call.1} parent=1 // pred_check
      _
    $region3: #{tpu_custom_call.1} parent=1 // pred_check_branch
      %11 = sbr.rel (0) target = $region5
    $region4: #{tpu_custom_call.1} parent=1 // pred_region
      _
    $region5: #{tpu_custom_call.1} parent=1 // pred_fallthru
      _
    // Predicated region
    $region6: #{tpu_custom_call.1} parent=1 // pred_check
      _
    $region7: #{tpu_custom_call.1} parent=1 // pred_check_branch
      %13 = sbr.rel (0) target = $region9
    $region8: #{tpu_custom_call.1} parent=1 // pred_region
      _
    $region9: #{tpu_custom_call.1} parent=1 // pred_fallthru
      _
    // Predicated region
    $region10: #{tpu_custom_call.1} parent=1 // pred_check
      _
    $region11: #{tpu_custom_call.1} parent=1 // pred_check_branch
      %15 = sbr.rel (0) target = $region13
    $region12: #{tpu_custom_call.1} parent=1 // pred_region
      _
    $region13: #{tpu_custom_call.1} parent=1 // pred_fallthru
      _
    // Predicated region
    $region14: #{tpu_custom_call.1} parent=1 // pred_check
      _
    $region15: #{tpu_custom_call.1} parent=1 // pred_check_branch
      %17 = sbr.rel (0) target = $region17
    $region16: #{tpu_custom_call.1} parent=1 // pred_region
      _
    $region17: #{tpu_custom_call.1} parent=1 // pred_fallthru
      _
    %v18 = vld [vmem:[%s0] sm:$0xff]
    %v19 = vld [vmem:[%s0 + $0x8] sm:$0xff]
    %v20 = vld [vmem:[%s0 + $0x10] sm:$0xff]
    %v21 = vld [vmem:[%s0 + $0x18] sm:$0xff]
    %v22 = vld [vmem:[%s0 + $0x20] sm:$0xff]
    %v23 = vld [vmem:[%s0 + $0x28] sm:$0xff]
    %v24 = vld [vmem:[%s0 + $0x30] sm:$0xff]
    %v25 = vld [vmem:[%s0 + $0x38] sm:$0xff]
    %v26 = vld [vmem:[%s1] sm:$0xff]
    %v27 = vld [vmem:[%s1 + $0x8] sm:$0xff]
    %v28 = vld [vmem:[%s1 + $0x10] sm:$0xff]
    %v29 = vld [vmem:[%s1 + $0x18] sm:$0xff]
    %v30 = vld [vmem:[%s2] sm:$0x1]
    %v32 = vlaneseq
    %v33 = vshrl.u32 %v32, 7
    %v34 = vsub.s32 0, %v33
    %v35 = vrot.slane %v30, %v34
    %vm37 = vcmask 261120
    %v39 = vsel %vm37, %v18, 0
    %v42 = vsel %vm37, %v19, 0
    %v45 = vsel %vm37, %v20, 0
    %v48 = vsel %vm37, %v21, 0
    %v51 = vsel %vm37, %v22, 0
    %v54 = vsel %vm37, %v23, 0
    %v57 = vsel %vm37, %v24, 0
    %v60 = vsel %vm37, %v25, 0
    %62 = vmatprep.subr.mxu0 0.0
    %63 = vmatpush1.msra.mxu0 %v26
    %64 = vmatprep.subr.mxu0 0.0
    %65 = vmatpush1.msra.mxu0 %v27
    %66 = vmatprep.subr.mxu0 0.0
    %67 = vmatpush1.msra.mxu0 %v28
    %68 = vmatprep.subr.mxu0 0.0
    %69 = vmatpush1.msra.mxu0 %v29
    %70 = vmatprep.subr.mxu0 0.0
    %71 = vmatpush1.msra.mxu0 0.0
    %72 = vmatprep.subr.mxu0 0.0
    %73 = vmatpush1.msra.mxu0 0.0
    %74 = vmatprep.subr.mxu0 0.0
    %75 = vmatpush1.msra.mxu0 0.0
    %76 = vmatprep.subr.mxu0 0.0
    %77 = vmatpush1.msra.mxu0 0.0
    %78 = vmatprep.subr.mxu0 0.0
    %79 = vmatpush1.msra.mxu0 0.0
    %80 = vmatprep.subr.mxu0 0.0
    %81 = vmatpush1.msra.mxu0 0.0
    %82 = vmatprep.subr.mxu0 0.0
    %83 = vmatpush1.msra.mxu0 0.0
    %84 = vmatprep.subr.mxu0 0.0
    %85 = vmatpush1.msra.mxu0 0.0
    %86 = vmatprep.subr.mxu0 0.0
    %87 = vmatpush1.msra.mxu0 0.0
    %88 = vmatprep.subr.mxu0 0.0
    %89 = vmatpush1.msra.mxu0 0.0
    %90 = vmatprep.subr.mxu0 0.0
    %91 = vmatpush1.msra.mxu0 0.0
    %92 = vmatprep.subr.mxu0 0.0
    %93 = vmatpush1.msra.mxu0 0.0
    %94 = vmatprep.subr.mxu0 0.0
    %95 = vmatpush1.msra.mxu0 0.0
    %96 = vmatprep.subr.mxu0 0.0
    %97 = vmatpush1.msra.mxu0 0.0
    %98 = vmatprep.subr.mxu0 0.0
    %99 = vmatpush1.msra.mxu0 0.0
    %100 = vmatprep.subr.mxu0 0.0
    %101 = vmatpush1.msra.mxu0 0.0
    %102 = vmatprep.subr.mxu0 0.0
    %103 = vmatpush1.msra.mxu0 0.0
    %104 = vmatprep.subr.mxu0 0.0
    %105 = vmatpush1.msra.mxu0 0.0
    %106 = vmatprep.subr.mxu0 0.0
    %107 = vmatpush1.msra.mxu0 0.0
    %108 = vmatprep.subr.mxu0 0.0
    %109 = vmatpush1.msra.mxu0 0.0
    %110 = vmatprep.subr.mxu0 0.0
    %111 = vmatpush1.msra.mxu0 0.0
    %112 = vmatprep.subr.mxu0 0.0
    %113 = vmatpush1.msra.mxu0 0.0
    %114 = vmatprep.subr.mxu0 0.0
    %115 = vmatpush1.msra.mxu0 0.0
    %116 = vmatprep.subr.mxu0 0.0
    %117 = vmatpush1.msra.mxu0 0.0
    %118 = vmatprep.subr.mxu0 0.0
    %119 = vmatpush1.msra.mxu0 0.0
    %120 = vmatprep.subr.mxu0 0.0
    %121 = vmatpush1.msra.mxu0 0.0
    %122 = vmatprep.subr.mxu0 0.0
    %123 = vmatpush1.msra.mxu0 0.0
    %124 = vmatprep.subr.mxu0 0.0
    %125 = vmatpush1.msra.mxu0 0.0
    %126 = vmatprep.mubr.f32.mxu0 0.0
    %127 = vmatmul.mubr.f32.gmra.mrb[0].mxu0 %v39
    %v128 = vpop.f32.mrb[0].mxu0
    %v129 = vadd.f32 %v35, %v128
    %v130 = vpop.f32.mrb[0].mxu0
    %131 = vmatprep.mubr.f32.mxu0 0.0
    %132 = vmatmul.mubr.f32.gmra.mrb[0].mxu0 %v42
    %v133 = vpop.f32.mrb[0].mxu0
    %v134 = vadd.f32 %v35, %v133
    %v135 = vpop.f32.mrb[0].mxu0
    %136 = vmatprep.mubr.f32.mxu0 0.0
    %137 = vmatmul.mubr.f32.gmra.mrb[0].mxu0 %v45
    %v138 = vpop.f32.mrb[0].mxu0
    %v139 = vadd.f32 %v35, %v138
    %v140 = vpop.f32.mrb[0].mxu0
    %141 = vmatprep.mubr.f32.mxu0 0.0
    %142 = vmatmul.mubr.f32.gmra.mrb[0].mxu0 %v48
    %v143 = vpop.f32.mrb[0].mxu0
    %v144 = vadd.f32 %v35, %v143
    %v145 = vpop.f32.mrb[0].mxu0
    %146 = vmatprep.mubr.f32.mxu0 0.0
    %147 = vmatmul.mubr.f32.gmra.mrb[0].mxu0 %v51
    %v148 = vpop.f32.mrb[0].mxu0
    %v149 = vadd.f32 %v35, %v148
    %v150 = vpop.f32.mrb[0].mxu0
    %151 = vmatprep.mubr.f32.mxu0 0.0
    %152 = vmatmul.mubr.f32.gmra.mrb[0].mxu0 %v54
    %v153 = vpop.f32.mrb[0].mxu0
    %v154 = vadd.f32 %v35, %v153
    %v155 = vpop.f32.mrb[0].mxu0
    %156 = vmatprep.mubr.f32.mxu0 0.0
    %157 = vmatmul.mubr.f32.gmra.mrb[0].mxu0 %v57
    %v158 = vpop.f32.mrb[0].mxu0
    %v159 = vadd.f32 %v35, %v158
    %v160 = vpop.f32.mrb[0].mxu0
    %161 = vmatprep.mubr.f32.mxu0 0.0
    %162 = vmatmul.mubr.f32.gmra.mrb[0].mxu0 %v60
    %v163 = vpop.f32.mrb[0].mxu0
    %v164 = vadd.f32 %v35, %v163
    %v165 = vpop.f32.mrb[0].mxu0
    %166 = vdwg.mxu0
    %167 = vst [vmem:[#allocation2] sm:$0xff] %v129
    %168 = vst [vmem:[#allocation2 + $0x8] sm:$0xff] %v134
    %169 = vst [vmem:[#allocation2 + $0x10] sm:$0xff] %v139
    %170 = vst [vmem:[#allocation2 + $0x18] sm:$0xff] %v144
    %171 = vst [vmem:[#allocation2 + $0x20] sm:$0xff] %v149
    %172 = vst [vmem:[#allocation2 + $0x28] sm:$0xff] %v154
    %173 = vst [vmem:[#allocation2 + $0x30] sm:$0xff] %v159
    %174 = vst [vmem:[#allocation2 + $0x38] sm:$0xff] %v164
    %v175 = vld [vmem:[%s3] sm:$0xff]
    %v176 = vld [vmem:[%s3 + $0x8] sm:$0xff]
    %v177 = vld [vmem:[%s3 + $0x10] sm:$0xff]
    %v178 = vld [vmem:[%s3 + $0x18] sm:$0xff]
    %v179 = vld [vmem:[#allocation2] sm:$0xff]
    %v181 = vsel %vm37, 0.0, 0
    %183 = vmatprep.subr.mxu0 0.0
    %184 = vmatpush1.msra.mxu0 %v175
    %185 = vmatprep.subr.mxu0 0.0
    %186 = vmatpush1.msra.mxu0 %v176
    %187 = vmatprep.subr.mxu0 0.0
    %188 = vmatpush1.msra.mxu0 %v177
    %189 = vmatprep.subr.mxu0 0.0
    %190 = vmatpush1.msra.mxu0 %v178
    %191 = vmatprep.subr.mxu0 0.0
    %192 = vmatpush1.msra.mxu0 0.0
    %193 = vmatprep.subr.mxu0 0.0
    %194 = vmatpush1.msra.mxu0 0.0
    %195 = vmatprep.subr.mxu0 0.0
    %196 = vmatpush1.msra.mxu0 0.0
    %197 = vmatprep.subr.mxu0 0.0
    %198 = vmatpush1.msra.mxu0 0.0
    %199 = vmatprep.subr.mxu0 0.0
    %200 = vmatpush1.msra.mxu0 0.0
    %201 = vmatprep.subr.mxu0 0.0
    %202 = vmatpush1.msra.mxu0 0.0
    %203 = vmatprep.subr.mxu0 0.0
    %204 = vmatpush1.msra.mxu0 0.0
    %205 = vmatprep.subr.mxu0 0.0
    %206 = vmatpush1.msra.mxu0 0.0
    %207 = vmatprep.subr.mxu0 0.0
    %208 = vmatpush1.msra.mxu0 0.0
    %209 = vmatprep.subr.mxu0 0.0
    %210 = vmatpush1.msra.mxu0 0.0
    %211 = vmatprep.subr.mxu0 0.0
    %212 = vmatpush1.msra.mxu0 0.0
    %213 = vmatprep.subr.mxu0 0.0
    %214 = vmatpush1.msra.mxu0 0.0
    %215 = vmatprep.subr.mxu0 0.0
    %216 = vmatpush1.msra.mxu0 0.0
    %217 = vmatprep.subr.mxu0 0.0
    %218 = vmatpush1.msra.mxu0 0.0
    %219 = vmatprep.subr.mxu0 0.0
    %220 = vmatpush1.msra.mxu0 0.0
    %221 = vmatprep.subr.mxu0 0.0
    %222 = vmatpush1.msra.mxu0 0.0
    %223 = vmatprep.subr.mxu0 0.0
    %224 = vmatpush1.msra.mxu0 0.0
    %225 = vmatprep.subr.mxu0 0.0
    %226 = vmatpush1.msra.mxu0 0.0
    %227 = vmatprep.subr.mxu0 0.0
    %228 = vmatpush1.msra.mxu0 0.0
    %229 = vmatprep.subr.mxu0 0.0
    %230 = vmatpush1.msra.mxu0 0.0
    %231 = vmatprep.subr.mxu0 0.0
    %232 = vmatpush1.msra.mxu0 0.0
    %233 = vmatprep.subr.mxu0 0.0
    %234 = vmatpush1.msra.mxu0 0.0
    %235 = vmatprep.subr.mxu0 0.0
    %236 = vmatpush1.msra.mxu0 0.0
    %237 = vmatprep.subr.mxu0 0.0
    %238 = vmatpush1.msra.mxu0 0.0
    %239 = vmatprep.subr.mxu0 0.0
    %240 = vmatpush1.msra.mxu0 0.0
    %241 = vmatprep.subr.mxu0 0.0
    %242 = vmatpush1.msra.mxu0 0.0
    %243 = vmatprep.subr.mxu0 0.0
    %244 = vmatpush1.msra.mxu0 0.0
    %245 = vmatprep.subr.mxu0 0.0
    %246 = vmatpush1.msra.mxu0 0.0
    %247 = vmatprep.mubr.f32.mxu0 0.0
    %248 = vmatmul.mubr.f32.gmra.mrb[0].mxu0 %v181
    %v249 = vpop.f32.mrb[0].mxu0
    %v250 = vadd.f32 0.0, %v249
    %v251 = vpop.f32.mrb[0].mxu0
    %252 = vdwg.mxu0
    %v253 = vadd.f32 %v179, %v250
    %v254 = vxor.u32 %v253, 2147483648
    %v255 = vmul.f32 %v254, 1.442695
    %v256 = vpow.pop %v255
    %v257 = vadd.f32 %v256, 1.0
    %v258 = vrcp.pop %v257
    %v259 = vmul.f32 1.0, %v258
    %v260 = vtanh.pop %v253
    %v261 = vmul.f32 %v259, 0.0
    %263 = vrot.lane.b32.xlu0 %v260, 64
    %v264 = vpop.permute.xlu0 %263
    %v266 = vmul.f32 %v259, %v264
    %268 = vrot.lane.b32.xlu0 %v266, 32
    %v269 = vpop.permute.xlu0 %268
    %v271 = vadd.f32 %v261, %v269
    %v272 = vtanh.pop %v271
    %274 = vrot.lane.b32.xlu0 %v272, 64
    %v275 = vpop.permute.xlu0 %274
    %v277 = vmul.f32 %v259, %v275
    %279 = vrot.lane.b32.xlu0 %v277, 32
    %v280 = vpop.permute.xlu0 %279
    %282 = vst.msk [vmem:[#allocation3] sm:$0xff] %vm37, %v280
    %s283 = scalar_lea.vmem [#allocation2], 8
    %v284 = vld [vmem:[%s283] sm:$0xff]
    %v285 = vsel %vm37, %v280, 0
    %287 = vmatprep.subr.mxu0 0.0
    %288 = vmatpush1.msra.mxu0 %v175
    %289 = vmatprep.subr.mxu0 0.0
    %290 = vmatpush1.msra.mxu0 %v176
    %291 = vmatprep.subr.mxu0 0.0
    %292 = vmatpush1.msra.mxu0 %v177
    %293 = vmatprep.subr.mxu0 0.0
    %294 = vmatpush1.msra.mxu0 %v178
    %295 = vmatprep.subr.mxu0 0.0
    %296 = vmatpush1.msra.mxu0 0.0
    %297 = vmatprep.subr.mxu0 0.0
    %298 = vmatpush1.msra.mxu0 0.0
    %299 = vmatprep.subr.mxu0 0.0
    %300 = vmatpush1.msra.mxu0 0.0
    %301 = vmatprep.subr.mxu0 0.0
    %302 = vmatpush1.msra.mxu0 0.0
    %303 = vmatprep.subr.mxu0 0.0
    %304 = vmatpush1.msra.mxu0 0.0
    %305 = vmatprep.subr.mxu0 0.0
    %306 = vmatpush1.msra.mxu0 0.0
    %307 = vmatprep.subr.mxu0 0.0
    %308 = vmatpush1.msra.mxu0 0.0
    %309 = vmatprep.subr.mxu0 0.0
    %310 = vmatpush1.msra.mxu0 0.0
    %311 = vmatprep.subr.mxu0 0.0
    %312 = vmatpush1.msra.mxu0 0.0
    %313 = vmatprep.subr.mxu0 0.0
    %314 = vmatpush1.msra.mxu0 0.0
    %315 = vmatprep.subr.mxu0 0.0
    %316 = vmatpush1.msra.mxu0 0.0
    %317 = vmatprep.subr.mxu0 0.0
    %318 = vmatpush1.msra.mxu0 0.0
    %319 = vmatprep.subr.mxu0 0.0
    %320 = vmatpush1.msra.mxu0 0.0
    %321 = vmatprep.subr.mxu0 0.0
    %322 = vmatpush1.msra.mxu0 0.0
    %323 = vmatprep.subr.mxu0 0.0
    %324 = vmatpush1.msra.mxu0 0.0
    %325 = vmatprep.subr.mxu0 0.0
    %326 = vmatpush1.msra.mxu0 0.0
    %327 = vmatprep.subr.mxu0 0.0
    %328 = vmatpush1.msra.mxu0 0.0
    %329 = vmatprep.subr.mxu0 0.0
    %330 = vmatpush1.msra.mxu0 0.0
    %331 = vmatprep.subr.mxu0 0.0
    %332 = vmatpush1.msra.mxu0 0.0
    %333 = vmatprep.subr.mxu0 0.0
    %334 = vmatpush1.msra.mxu0 0.0
    %335 = vmatprep.subr.mxu0 0.0
    %336 = vmatpush1.msra.mxu0 0.0
    %337 = vmatprep.subr.mxu0 0.0
    %338 = vmatpush1.msra.mxu0 0.0
    %339 = vmatprep.subr.mxu0 0.0
    %340 = vmatpush1.msra.mxu0 0.0
    %341 = vmatprep.subr.mxu0 0.0
    %342 = vmatpush1.msra.mxu0 0.0
    %343 = vmatprep.subr.mxu0 0.0
    %344 = vmatpush1.msra.mxu0 0.0
    %345 = vmatprep.subr.mxu0 0.0
    %346 = vmatpush1.msra.mxu0 0.0
    %347 = vmatprep.subr.mxu0 0.0
    %348 = vmatpush1.msra.mxu0 0.0
    %349 = vmatprep.subr.mxu0 0.0
    %350 = vmatpush1.msra.mxu0 0.0
    %351 = vmatprep.mubr.f32.mxu0 0.0
    %352 = vmatmul.mubr.f32.gmra.mrb[0].mxu0 %v285
    %v353 = vpop.f32.mrb[0].mxu0
    %v354 = vadd.f32 0.0, %v353
    %v355 = vpop.f32.mrb[0].mxu0
    %356 = vdwg.mxu0
    %v357 = vadd.f32 %v284, %v354
    %v358 = vxor.u32 %v357, 2147483648
    %v359 = vmul.f32 %v358, 1.442695
    %v360 = vpow.pop %v359
    %v361 = vadd.f32 %v360, 1.0
    %v362 = vrcp.pop %v361
    %v363 = vmul.f32 1.0, %v362
    %v364 = vtanh.pop %v357
    %v365 = vmul.f32 %v363, %v271
    %367 = vrot.lane.b32.xlu0 %v364, 64
    %v368 = vpop.permute.xlu0 %367
    %v370 = vmul.f32 %v363, %v368
    %372 = vrot.lane.b32.xlu0 %v370, 32
    %v373 = vpop.permute.xlu0 %372
    %v375 = vadd.f32 %v365, %v373
    %v376 = vtanh.pop %v375
    %378 = vrot.lane.b32.xlu0 %v376, 64
    %v379 = vpop.permute.xlu0 %378
    %v381 = vmul.f32 %v363, %v379
    %383 = vrot.lane.b32.xlu0 %v381, 32
    %v384 = vpop.permute.xlu0 %383
    %s386 = scalar_lea.vmem [#allocation3], 8
    %387 = vst.msk [vmem:[%s386] sm:$0xff] %vm37, %v384
    %s388 = scalar_lea.vmem [#allocation2], 16
    %v389 = vld [vmem:[%s388] sm:$0xff]
    %v390 = vsel %vm37, %v384, 0
    %392 = vmatprep.subr.mxu0 0.0
    %393 = vmatpush1.msra.mxu0 %v175
    %394 = vmatprep.subr.mxu0 0.0
    %395 = vmatpush1.msra.mxu0 %v176
    %396 = vmatprep.subr.mxu0 0.0
    %397 = vmatpush1.msra.mxu0 %v177
    %398 = vmatprep.subr.mxu0 0.0
    %399 = vmatpush1.msra.mxu0 %v178
    %400 = vmatprep.subr.mxu0 0.0
    %401 = vmatpush1.msra.mxu0 0.0
    %402 = vmatprep.subr.mxu0 0.0
    %403 = vmatpush1.msra.mxu0 0.0
    %404 = vmatprep.subr.mxu0 0.0
    %405 = vmatpush1.msra.mxu0 0.0
    %406 = vmatprep.subr.mxu0 0.0
    %407 = vmatpush1.msra.mxu0 0.0
    %408 = vmatprep.subr.mxu0 0.0
    %409 = vmatpush1.msra.mxu0 0.0
    %410 = vmatprep.subr.mxu0 0.0
    %411 = vmatpush1.msra.mxu0 0.0
    %412 = vmatprep.subr.mxu0 0.0
    %413 = vmatpush1.msra.mxu0 0.0
    %414 = vmatprep.subr.mxu0 0.0
    %415 = vmatpush1.msra.mxu0 0.0
    %416 = vmatprep.subr.mxu0 0.0
    %417 = vmatpush1.msra.mxu0 0.0
    %418 = vmatprep.subr.mxu0 0.0
    %419 = vmatpush1.msra.mxu0 0.0
    %420 = vmatprep.subr.mxu0 0.0
    %421 = vmatpush1.msra.mxu0 0.0
    %422 = vmatprep.subr.mxu0 0.0
    %423 = vmatpush1.msra.mxu0 0.0
    %424 = vmatprep.subr.mxu0 0.0
    %425 = vmatpush1.msra.mxu0 0.0
    %426 = vmatprep.subr.mxu0 0.0
    %427 = vmatpush1.msra.mxu0 0.0
    %428 = vmatprep.subr.mxu0 0.0
    %429 = vmatpush1.msra.mxu0 0.0
    %430 = vmatprep.subr.mxu0 0.0
    %431 = vmatpush1.msra.mxu0 0.0
    %432 = vmatprep.subr.mxu0 0.0
    %433 = vmatpush1.msra.mxu0 0.0
    %434 = vmatprep.subr.mxu0 0.0
    %435 = vmatpush1.msra.mxu0 0.0
    %436 = vmatprep.subr.mxu0 0.0
    %437 = vmatpush1.msra.mxu0 0.0
    %438 = vmatprep.subr.mxu0 0.0
    %439 = vmatpush1.msra.mxu0 0.0
    %440 = vmatprep.subr.mxu0 0.0
    %441 = vmatpush1.msra.mxu0 0.0
    %442 = vmatprep.subr.mxu0 0.0
    %443 = vmatpush1.msra.mxu0 0.0
    %444 = vmatprep.subr.mxu0 0.0
    %445 = vmatpush1.msra.mxu0 0.0
    %446 = vmatprep.subr.mxu0 0.0
    %447 = vmatpush1.msra.mxu0 0.0
    %448 = vmatprep.subr.mxu0 0.0
    %449 = vmatpush1.msra.mxu0 0.0
    %450 = vmatprep.subr.mxu0 0.0
    %451 = vmatpush1.msra.mxu0 0.0
    %452 = vmatprep.subr.mxu0 0.0
    %453 = vmatpush1.msra.mxu0 0.0
    %454 = vmatprep.subr.mxu0 0.0
    %455 = vmatpush1.msra.mxu0 0.0
    %456 = vmatprep.mubr.f32.mxu0 0.0
    %457 = vmatmul.mubr.f32.gmra.mrb[0].mxu0 %v390
    %v458 = vpop.f32.mrb[0].mxu0
    %v459 = vadd.f32 0.0, %v458
    %v460 = vpop.f32.mrb[0].mxu0
    %461 = vdwg.mxu0
    %v462 = vadd.f32 %v389, %v459
    %v463 = vxor.u32 %v462, 2147483648
    %v464 = vmul.f32 %v463, 1.442695
    %v465 = vpow.pop %v464
    %v466 = vadd.f32 %v465, 1.0
    %v467 = vrcp.pop %v466
    %v468 = vmul.f32 1.0, %v467
    %v469 = vtanh.pop %v462
    %v470 = vmul.f32 %v468, %v375
    %472 = vrot.lane.b32.xlu0 %v469, 64
    %v473 = vpop.permute.xlu0 %472
    %v475 = vmul.f32 %v468, %v473
    %477 = vrot.lane.b32.xlu0 %v475, 32
    %v478 = vpop.permute.xlu0 %477
    %v480 = vadd.f32 %v470, %v478
    %v481 = vtanh.pop %v480
    %483 = vrot.lane.b32.xlu0 %v481, 64
    %v484 = vpop.permute.xlu0 %483
    %v486 = vmul.f32 %v468, %v484
    %488 = vrot.lane.b32.xlu0 %v486, 32
    %v489 = vpop.permute.xlu0 %488
    %s491 = scalar_lea.vmem [#allocation3], 16
    %492 = vst.msk [vmem:[%s491] sm:$0xff] %vm37, %v489
    %s493 = scalar_lea.vmem [#allocation2], 24
    %v494 = vld [vmem:[%s493] sm:$0xff]
    %v495 = vsel %vm37, %v489, 0
    %497 = vmatprep.subr.mxu0 0.0
    %498 = vmatpush1.msra.mxu0 %v175
    %499 = vmatprep.subr.mxu0 0.0
    %500 = vmatpush1.msra.mxu0 %v176
    %501 = vmatprep.subr.mxu0 0.0
    %502 = vmatpush1.msra.mxu0 %v177
    %503 = vmatprep.subr.mxu0 0.0
    %504 = vmatpush1.msra.mxu0 %v178
    %505 = vmatprep.subr.mxu0 0.0
    %506 = vmatpush1.msra.mxu0 0.0
    %507 = vmatprep.subr.mxu0 0.0
    %508 = vmatpush1.msra.mxu0 0.0
    %509 = vmatprep.subr.mxu0 0.0
    %510 = vmatpush1.msra.mxu0 0.0
    %511 = vmatprep.subr.mxu0 0.0
    %512 = vmatpush1.msra.mxu0 0.0
    %513 = vmatprep.subr.mxu0 0.0
    %514 = vmatpush1.msra.mxu0 0.0
    %515 = vmatprep.subr.mxu0 0.0
    %516 = vmatpush1.msra.mxu0 0.0
    %517 = vmatprep.subr.mxu0 0.0
    %518 = vmatpush1.msra.mxu0 0.0
    %519 = vmatprep.subr.mxu0 0.0
    %520 = vmatpush1.msra.mxu0 0.0
    %521 = vmatprep.subr.mxu0 0.0
    %522 = vmatpush1.msra.mxu0 0.0
    %523 = vmatprep.subr.mxu0 0.0
    %524 = vmatpush1.msra.mxu0 0.0
    %525 = vmatprep.subr.mxu0 0.0
    %526 = vmatpush1.msra.mxu0 0.0
    %527 = vmatprep.subr.mxu0 0.0
    %528 = vmatpush1.msra.mxu0 0.0
    %529 = vmatprep.subr.mxu0 0.0
    %530 = vmatpush1.msra.mxu0 0.0
    %531 = vmatprep.subr.mxu0 0.0
    %532 = vmatpush1.msra.mxu0 0.0
    %533 = vmatprep.subr.mxu0 0.0
    %534 = vmatpush1.msra.mxu0 0.0
    %535 = vmatprep.subr.mxu0 0.0
    %536 = vmatpush1.msra.mxu0 0.0
    %537 = vmatprep.subr.mxu0 0.0
    %538 = vmatpush1.msra.mxu0 0.0
    %539 = vmatprep.subr.mxu0 0.0
    %540 = vmatpush1.msra.mxu0 0.0
    %541 = vmatprep.subr.mxu0 0.0
    %542 = vmatpush1.msra.mxu0 0.0
    %543 = vmatprep.subr.mxu0 0.0
    %544 = vmatpush1.msra.mxu0 0.0
    %545 = vmatprep.subr.mxu0 0.0
    %546 = vmatpush1.msra.mxu0 0.0
    %547 = vmatprep.subr.mxu0 0.0
    %548 = vmatpush1.msra.mxu0 0.0
    %549 = vmatprep.subr.mxu0 0.0
    %550 = vmatpush1.msra.mxu0 0.0
    %551 = vmatprep.subr.mxu0 0.0
    %552 = vmatpush1.msra.mxu0 0.0
    %553 = vmatprep.subr.mxu0 0.0
    %554 = vmatpush1.msra.mxu0 0.0
    %555 = vmatprep.subr.mxu0 0.0
    %556 = vmatpush1.msra.mxu0 0.0
    %557 = vmatprep.subr.mxu0 0.0
    %558 = vmatpush1.msra.mxu0 0.0
    %559 = vmatprep.subr.mxu0 0.0
    %560 = vmatpush1.msra.mxu0 0.0
    %561 = vmatprep.mubr.f32.mxu0 0.0
    %562 = vmatmul.mubr.f32.gmra.mrb[0].mxu0 %v495
    %v563 = vpop.f32.mrb[0].mxu0
    %v564 = vadd.f32 0.0, %v563
    %v565 = vpop.f32.mrb[0].mxu0
    %566 = vdwg.mxu0
    %v567 = vadd.f32 %v494, %v564
    %v568 = vxor.u32 %v567, 2147483648
    %v569 = vmul.f32 %v568, 1.442695
    %v570 = vpow.pop %v569
    %v571 = vadd.f32 %v570, 1.0
    %v572 = vrcp.pop %v571
    %v573 = vmul.f32 1.0, %v572
    %v574 = vtanh.pop %v567
    %v575 = vmul.f32 %v573, %v480
    %577 = vrot.lane.b32.xlu0 %v574, 64
    %v578 = vpop.permute.xlu0 %577
    %v580 = vmul.f32 %v573, %v578
    %582 = vrot.lane.b32.xlu0 %v580, 32
    %v583 = vpop.permute.xlu0 %582
    %v585 = vadd.f32 %v575, %v583
    %v586 = vtanh.pop %v585
    %588 = vrot.lane.b32.xlu0 %v586, 64
    %v589 = vpop.permute.xlu0 %588
    %v591 = vmul.f32 %v573, %v589
    %593 = vrot.lane.b32.xlu0 %v591, 32
    %v594 = vpop.permute.xlu0 %593
    %s596 = scalar_lea.vmem [#allocation3], 24
    %597 = vst.msk [vmem:[%s596] sm:$0xff] %vm37, %v594
    %s598 = scalar_lea.vmem [#allocation2], 32
    %v599 = vld [vmem:[%s598] sm:$0xff]
    %v600 = vsel %vm37, %v594, 0
    %602 = vmatprep.subr.mxu0 0.0
    %603 = vmatpush1.msra.mxu0 %v175
    %604 = vmatprep.subr.mxu0 0.0
    %605 = vmatpush1.msra.mxu0 %v176
    %606 = vmatprep.subr.mxu0 0.0
    %607 = vmatpush1.msra.mxu0 %v177
    %608 = vmatprep.subr.mxu0 0.0
    %609 = vmatpush1.msra.mxu0 %v178
    %610 = vmatprep.subr.mxu0 0.0
    %611 = vmatpush1.msra.mxu0 0.0
    %612 = vmatprep.subr.mxu0 0.0
    %613 = vmatpush1.msra.mxu0 0.0
    %614 = vmatprep.subr.mxu0 0.0
    %615 = vmatpush1.msra.mxu0 0.0
    %616 = vmatprep.subr.mxu0 0.0
    %617 = vmatpush1.msra.mxu0 0.0
    %618 = vmatprep.subr.mxu0 0.0
    %619 = vmatpush1.msra.mxu0 0.0
    %620 = vmatprep.subr.mxu0 0.0
    %621 = vmatpush1.msra.mxu0 0.0
    %622 = vmatprep.subr.mxu0 0.0
    %623 = vmatpush1.msra.mxu0 0.0
    %624 = vmatprep.subr.mxu0 0.0
    %625 = vmatpush1.msra.mxu0 0.0
    %626 = vmatprep.subr.mxu0 0.0
    %627 = vmatpush1.msra.mxu0 0.0
    %628 = vmatprep.subr.mxu0 0.0
    %629 = vmatpush1.msra.mxu0 0.0
    %630 = vmatprep.subr.mxu0 0.0
    %631 = vmatpush1.msra.mxu0 0.0
    %632 = vmatprep.subr.mxu0 0.0
    %633 = vmatpush1.msra.mxu0 0.0
    %634 = vmatprep.subr.mxu0 0.0
    %635 = vmatpush1.msra.mxu0 0.0
    %636 = vmatprep.subr.mxu0 0.0
    %637 = vmatpush1.msra.mxu0 0.0
    %638 = vmatprep.subr.mxu0 0.0
    %639 = vmatpush1.msra.mxu0 0.0
    %640 = vmatprep.subr.mxu0 0.0
    %641 = vmatpush1.msra.mxu0 0.0
    %642 = vmatprep.subr.mxu0 0.0
    %643 = vmatpush1.msra.mxu0 0.0
    %644 = vmatprep.subr.mxu0 0.0
    %645 = vmatpush1.msra.mxu0 0.0
    %646 = vmatprep.subr.mxu0 0.0
    %647 = vmatpush1.msra.mxu0 0.0
    %648 = vmatprep.subr.mxu0 0.0
    %649 = vmatpush1.msra.mxu0 0.0
    %650 = vmatprep.subr.mxu0 0.0
    %651 = vmatpush1.msra.mxu0 0.0
    %652 = vmatprep.subr.mxu0 0.0
    %653 = vmatpush1.msra.mxu0 0.0
    %654 = vmatprep.subr.mxu0 0.0
    %655 = vmatpush1.msra.mxu0 0.0
    %656 = vmatprep.subr.mxu0 0.0
    %657 = vmatpush1.msra.mxu0 0.0
    %658 = vmatprep.subr.mxu0 0.0
    %659 = vmatpush1.msra.mxu0 0.0
    %660 = vmatprep.subr.mxu0 0.0
    %661 = vmatpush1.msra.mxu0 0.0
    %662 = vmatprep.subr.mxu0 0.0
    %663 = vmatpush1.msra.mxu0 0.0
    %664 = vmatprep.subr.mxu0 0.0
    %665 = vmatpush1.msra.mxu0 0.0
    %666 = vmatprep.mubr.f32.mxu0 0.0
    %667 = vmatmul.mubr.f32.gmra.mrb[0].mxu0 %v600
    %v668 = vpop.f32.mrb[0].mxu0
    %v669 = vadd.f32 0.0, %v668
    %v670 = vpop.f32.mrb[0].mxu0
    %671 = vdwg.mxu0
    %v672 = vadd.f32 %v599, %v669
    %v673 = vxor.u32 %v672, 2147483648
    %v674 = vmul.f32 %v673, 1.442695
    %v675 = vpow.pop %v674
    %v676 = vadd.f32 %v675, 1.0
    %v677 = vrcp.pop %v676
    %v678 = vmul.f32 1.0, %v677
    %v679 = vtanh.pop %v672
    %v680 = vmul.f32 %v678, %v585
    %682 = vrot.lane.b32.xlu0 %v679, 64
    %v683 = vpop.permute.xlu0 %682
    %v685 = vmul.f32 %v678, %v683
    %687 = vrot.lane.b32.xlu0 %v685, 32
    %v688 = vpop.permute.xlu0 %687
    %v690 = vadd.f32 %v680, %v688
    %v691 = vtanh.pop %v690
    %693 = vrot.lane.b32.xlu0 %v691, 64
    %v694 = vpop.permute.xlu0 %693
    %v696 = vmul.f32 %v678, %v694
    %698 = vrot.lane.b32.xlu0 %v696, 32
    %v699 = vpop.permute.xlu0 %698
    %s701 = scalar_lea.vmem [#allocation3], 32
    %702 = vst.msk [vmem:[%s701] sm:$0xff] %vm37, %v699
    %s703 = scalar_lea.vmem [#allocation2], 40
    %v704 = vld [vmem:[%s703] sm:$0xff]
    %v705 = vsel %vm37, %v699, 0
    %707 = vmatprep.subr.mxu0 0.0
    %708 = vmatpush1.msra.mxu0 %v175
    %709 = vmatprep.subr.mxu0 0.0
    %710 = vmatpush1.msra.mxu0 %v176
    %711 = vmatprep.subr.mxu0 0.0
    %712 = vmatpush1.msra.mxu0 %v177
    %713 = vmatprep.subr.mxu0 0.0
    %714 = vmatpush1.msra.mxu0 %v178
    %715 = vmatprep.subr.mxu0 0.0
    %716 = vmatpush1.msra.mxu0 0.0
    %717 = vmatprep.subr.mxu0 0.0
    %718 = vmatpush1.msra.mxu0 0.0
    %719 = vmatprep.subr.mxu0 0.0
    %720 = vmatpush1.msra.mxu0 0.0
    %721 = vmatprep.subr.mxu0 0.0
    %722 = vmatpush1.msra.mxu0 0.0
    %723 = vmatprep.subr.mxu0 0.0
    %724 = vmatpush1.msra.mxu0 0.0
    %725 = vmatprep.subr.mxu0 0.0
    %726 = vmatpush1.msra.mxu0 0.0
    %727 = vmatprep.subr.mxu0 0.0
    %728 = vmatpush1.msra.mxu0 0.0
    %729 = vmatprep.subr.mxu0 0.0
    %730 = vmatpush1.msra.mxu0 0.0
    %731 = vmatprep.subr.mxu0 0.0
    %732 = vmatpush1.msra.mxu0 0.0
    %733 = vmatprep.subr.mxu0 0.0
    %734 = vmatpush1.msra.mxu0 0.0
    %735 = vmatprep.subr.mxu0 0.0
    %736 = vmatpush1.msra.mxu0 0.0
    %737 = vmatprep.subr.mxu0 0.0
    %738 = vmatpush1.msra.mxu0 0.0
    %739 = vmatprep.subr.mxu0 0.0
    %740 = vmatpush1.msra.mxu0 0.0
    %741 = vmatprep.subr.mxu0 0.0
    %742 = vmatpush1.msra.mxu0 0.0
    %743 = vmatprep.subr.mxu0 0.0
    %744 = vmatpush1.msra.mxu0 0.0
    %745 = vmatprep.subr.mxu0 0.0
    %746 = vmatpush1.msra.mxu0 0.0
    %747 = vmatprep.subr.mxu0 0.0
    %748 = vmatpush1.msra.mxu0 0.0
    %749 = vmatprep.subr.mxu0 0.0
    %750 = vmatpush1.msra.mxu0 0.0
    %751 = vmatprep.subr.mxu0 0.0
    %752 = vmatpush1.msra.mxu0 0.0
    %753 = vmatprep.subr.mxu0 0.0
    %754 = vmatpush1.msra.mxu0 0.0
    %755 = vmatprep.subr.mxu0 0.0
    %756 = vmatpush1.msra.mxu0 0.0
    %757 = vmatprep.subr.mxu0 0.0
    %758 = vmatpush1.msra.mxu0 0.0
    %759 = vmatprep.subr.mxu0 0.0
    %760 = vmatpush1.msra.mxu0 0.0
    %761 = vmatprep.subr.mxu0 0.0
    %762 = vmatpush1.msra.mxu0 0.0
    %763 = vmatprep.subr.mxu0 0.0
    %764 = vmatpush1.msra.mxu0 0.0
    %765 = vmatprep.subr.mxu0 0.0
    %766 = vmatpush1.msra.mxu0 0.0
    %767 = vmatprep.subr.mxu0 0.0
    %768 = vmatpush1.msra.mxu0 0.0
    %769 = vmatprep.subr.mxu0 0.0
    %770 = vmatpush1.msra.mxu0 0.0
    %771 = vmatprep.mubr.f32.mxu0 0.0
    %772 = vmatmul.mubr.f32.gmra.mrb[0].mxu0 %v705
    %v773 = vpop.f32.mrb[0].mxu0
    %v774 = vadd.f32 0.0, %v773
    %v775 = vpop.f32.mrb[0].mxu0
    %776 = vdwg.mxu0
    %v777 = vadd.f32 %v704, %v774
    %v778 = vxor.u32 %v777, 2147483648
    %v779 = vmul.f32 %v778, 1.442695
    %v780 = vpow.pop %v779
    %v781 = vadd.f32 %v780, 1.0
    %v782 = vrcp.pop %v781
    %v783 = vmul.f32 1.0, %v782
    %v784 = vtanh.pop %v777
    %v785 = vmul.f32 %v783, %v690
    %787 = vrot.lane.b32.xlu0 %v784, 64
    %v788 = vpop.permute.xlu0 %787
    %v790 = vmul.f32 %v783, %v788
    %792 = vrot.lane.b32.xlu0 %v790, 32
    %v793 = vpop.permute.xlu0 %792
    %v795 = vadd.f32 %v785, %v793
    %v796 = vtanh.pop %v795
    %798 = vrot.lane.b32.xlu0 %v796, 64
    %v799 = vpop.permute.xlu0 %798
    %v801 = vmul.f32 %v783, %v799
    %803 = vrot.lane.b32.xlu0 %v801, 32
    %v804 = vpop.permute.xlu0 %803
    %s806 = scalar_lea.vmem [#allocation3], 40
    %807 = vst.msk [vmem:[%s806] sm:$0xff] %vm37, %v804
    %s808 = scalar_lea.vmem [#allocation2], 48
    %v809 = vld [vmem:[%s808] sm:$0xff]
    %v810 = vsel %vm37, %v804, 0
    %812 = vmatprep.subr.mxu0 0.0
    %813 = vmatpush1.msra.mxu0 %v175
    %814 = vmatprep.subr.mxu0 0.0
    %815 = vmatpush1.msra.mxu0 %v176
    %816 = vmatprep.subr.mxu0 0.0
    %817 = vmatpush1.msra.mxu0 %v177
    %818 = vmatprep.subr.mxu0 0.0
    %819 = vmatpush1.msra.mxu0 %v178
    %820 = vmatprep.subr.mxu0 0.0
    %821 = vmatpush1.msra.mxu0 0.0
    %822 = vmatprep.subr.mxu0 0.0
    %823 = vmatpush1.msra.mxu0 0.0
    %824 = vmatprep.subr.mxu0 0.0
    %825 = vmatpush1.msra.mxu0 0.0
    %826 = vmatprep.subr.mxu0 0.0
    %827 = vmatpush1.msra.mxu0 0.0
    %828 = vmatprep.subr.mxu0 0.0
    %829 = vmatpush1.msra.mxu0 0.0
    %830 = vmatprep.subr.mxu0 0.0
    %831 = vmatpush1.msra.mxu0 0.0
    %832 = vmatprep.subr.mxu0 0.0
    %833 = vmatpush1.msra.mxu0 0.0
    %834 = vmatprep.subr.mxu0 0.0
    %835 = vmatpush1.msra.mxu0 0.0
    %836 = vmatprep.subr.mxu0 0.0
    %837 = vmatpush1.msra.mxu0 0.0
    %838 = vmatprep.subr.mxu0 0.0
    %839 = vmatpush1.msra.mxu0 0.0
    %840 = vmatprep.subr.mxu0 0.0
    %841 = vmatpush1.msra.mxu0 0.0
    %842 = vmatprep.subr.mxu0 0.0
    %843 = vmatpush1.msra.mxu0 0.0
    %844 = vmatprep.subr.mxu0 0.0
    %845 = vmatpush1.msra.mxu0 0.0
    %846 = vmatprep.subr.mxu0 0.0
    %847 = vmatpush1.msra.mxu0 0.0
    %848 = vmatprep.subr.mxu0 0.0
    %849 = vmatpush1.msra.mxu0 0.0
    %850 = vmatprep.subr.mxu0 0.0
    %851 = vmatpush1.msra.mxu0 0.0
    %852 = vmatprep.subr.mxu0 0.0
    %853 = vmatpush1.msra.mxu0 0.0
    %854 = vmatprep.subr.mxu0 0.0
    %855 = vmatpush1.msra.mxu0 0.0
    %856 = vmatprep.subr.mxu0 0.0
    %857 = vmatpush1.msra.mxu0 0.0
    %858 = vmatprep.subr.mxu0 0.0
    %859 = vmatpush1.msra.mxu0 0.0
    %860 = vmatprep.subr.mxu0 0.0
    %861 = vmatpush1.msra.mxu0 0.0
    %862 = vmatprep.subr.mxu0 0.0
    %863 = vmatpush1.msra.mxu0 0.0
    %864 = vmatprep.subr.mxu0 0.0
    %865 = vmatpush1.msra.mxu0 0.0
    %866 = vmatprep.subr.mxu0 0.0
    %867 = vmatpush1.msra.mxu0 0.0
    %868 = vmatprep.subr.mxu0 0.0
    %869 = vmatpush1.msra.mxu0 0.0
    %870 = vmatprep.subr.mxu0 0.0
    %871 = vmatpush1.msra.mxu0 0.0
    %872 = vmatprep.subr.mxu0 0.0
    %873 = vmatpush1.msra.mxu0 0.0
    %874 = vmatprep.subr.mxu0 0.0
    %875 = vmatpush1.msra.mxu0 0.0
    %876 = vmatprep.mubr.f32.mxu0 0.0
    %877 = vmatmul.mubr.f32.gmra.mrb[0].mxu0 %v810
    %v878 = vpop.f32.mrb[0].mxu0
    %v879 = vadd.f32 0.0, %v878
    %v880 = vpop.f32.mrb[0].mxu0
    %881 = vdwg.mxu0
    %v882 = vadd.f32 %v809, %v879
    %v883 = vxor.u32 %v882, 2147483648
    %v884 = vmul.f32 %v883, 1.442695
    %v885 = vpow.pop %v884
    %v886 = vadd.f32 %v885, 1.0
    %v887 = vrcp.pop %v886
    %v888 = vmul.f32 1.0, %v887
    %v889 = vtanh.pop %v882
    %v890 = vmul.f32 %v888, %v795
    %892 = vrot.lane.b32.xlu0 %v889, 64
    %v893 = vpop.permute.xlu0 %892
    %v895 = vmul.f32 %v888, %v893
    %897 = vrot.lane.b32.xlu0 %v895, 32
    %v898 = vpop.permute.xlu0 %897
    %v900 = vadd.f32 %v890, %v898
    %v901 = vtanh.pop %v900
    %903 = vrot.lane.b32.xlu0 %v901, 64
    %v904 = vpop.permute.xlu0 %903
    %v906 = vmul.f32 %v888, %v904
    %908 = vrot.lane.b32.xlu0 %v906, 32
    %v909 = vpop.permute.xlu0 %908
    %s911 = scalar_lea.vmem [#allocation3], 48
    %912 = vst.msk [vmem:[%s911] sm:$0xff] %vm37, %v909
    %s913 = scalar_lea.vmem [#allocation2], 56
    %v914 = vld [vmem:[%s913] sm:$0xff]
    %v915 = vsel %vm37, %v909, 0
    %917 = vmatprep.subr.mxu0 0.0
    %918 = vmatpush1.msra.mxu0 %v175
    %919 = vmatprep.subr.mxu0 0.0
    %920 = vmatpush1.msra.mxu0 %v176
    %921 = vmatprep.subr.mxu0 0.0
    %922 = vmatpush1.msra.mxu0 %v177
    %923 = vmatprep.subr.mxu0 0.0
    %924 = vmatpush1.msra.mxu0 %v178
    %925 = vmatprep.subr.mxu0 0.0
    %926 = vmatpush1.msra.mxu0 0.0
    %927 = vmatprep.subr.mxu0 0.0
    %928 = vmatpush1.msra.mxu0 0.0
    %929 = vmatprep.subr.mxu0 0.0
    %930 = vmatpush1.msra.mxu0 0.0
    %931 = vmatprep.subr.mxu0 0.0
    %932 = vmatpush1.msra.mxu0 0.0
    %933 = vmatprep.subr.mxu0 0.0
    %934 = vmatpush1.msra.mxu0 0.0
    %935 = vmatprep.subr.mxu0 0.0
    %936 = vmatpush1.msra.mxu0 0.0
    %937 = vmatprep.subr.mxu0 0.0
    %938 = vmatpush1.msra.mxu0 0.0
    %939 = vmatprep.subr.mxu0 0.0
    %940 = vmatpush1.msra.mxu0 0.0
    %941 = vmatprep.subr.mxu0 0.0
    %942 = vmatpush1.msra.mxu0 0.0
    %943 = vmatprep.subr.mxu0 0.0
    %944 = vmatpush1.msra.mxu0 0.0
    %945 = vmatprep.subr.mxu0 0.0
    %946 = vmatpush1.msra.mxu0 0.0
    %947 = vmatprep.subr.mxu0 0.0
    %948 = vmatpush1.msra.mxu0 0.0
    %949 = vmatprep.subr.mxu0 0.0
    %950 = vmatpush1.msra.mxu0 0.0
    %951 = vmatprep.subr.mxu0 0.0
    %952 = vmatpush1.msra.mxu0 0.0
    %953 = vmatprep.subr.mxu0 0.0
    %954 = vmatpush1.msra.mxu0 0.0
    %955 = vmatprep.subr.mxu0 0.0
    %956 = vmatpush1.msra.mxu0 0.0
    %957 = vmatprep.subr.mxu0 0.0
    %958 = vmatpush1.msra.mxu0 0.0
    %959 = vmatprep.subr.mxu0 0.0
    %960 = vmatpush1.msra.mxu0 0.0
    %961 = vmatprep.subr.mxu0 0.0
    %962 = vmatpush1.msra.mxu0 0.0
    %963 = vmatprep.subr.mxu0 0.0
    %964 = vmatpush1.msra.mxu0 0.0
    %965 = vmatprep.subr.mxu0 0.0
    %966 = vmatpush1.msra.mxu0 0.0
    %967 = vmatprep.subr.mxu0 0.0
    %968 = vmatpush1.msra.mxu0 0.0
    %969 = vmatprep.subr.mxu0 0.0
    %970 = vmatpush1.msra.mxu0 0.0
    %971 = vmatprep.subr.mxu0 0.0
    %972 = vmatpush1.msra.mxu0 0.0
    %973 = vmatprep.subr.mxu0 0.0
    %974 = vmatpush1.msra.mxu0 0.0
    %975 = vmatprep.subr.mxu0 0.0
    %976 = vmatpush1.msra.mxu0 0.0
    %977 = vmatprep.subr.mxu0 0.0
    %978 = vmatpush1.msra.mxu0 0.0
    %979 = vmatprep.subr.mxu0 0.0
    %980 = vmatpush1.msra.mxu0 0.0
    %981 = vmatprep.mubr.f32.mxu0 0.0
    %982 = vmatmul.mubr.f32.gmra.mrb[0].mxu0 %v915
    %v983 = vpop.f32.mrb[0].mxu0
    %v984 = vadd.f32 0.0, %v983
    %v985 = vpop.f32.mrb[0].mxu0
    %986 = vdwg.mxu0
    %v987 = vadd.f32 %v914, %v984
    %v988 = vxor.u32 %v987, 2147483648
    %v989 = vmul.f32 %v988, 1.442695
    %v990 = vpow.pop %v989
    %v991 = vadd.f32 %v990, 1.0
    %v992 = vrcp.pop %v991
    %v993 = vmul.f32 1.0, %v992
    %v994 = vtanh.pop %v987
    %v995 = vmul.f32 %v993, %v900
    %997 = vrot.lane.b32.xlu0 %v994, 64
    %v998 = vpop.permute.xlu0 %997
    %v1000 = vmul.f32 %v993, %v998
    %1002 = vrot.lane.b32.xlu0 %v1000, 32
    %v1003 = vpop.permute.xlu0 %1002
    %v1005 = vadd.f32 %v995, %v1003
    %v1006 = vtanh.pop %v1005
    %1008 = vrot.lane.b32.xlu0 %v1006, 64
    %v1009 = vpop.permute.xlu0 %1008
    %v1011 = vmul.f32 %v993, %v1009
    %1013 = vrot.lane.b32.xlu0 %v1011, 32
    %v1014 = vpop.permute.xlu0 %1013
    %s1016 = scalar_lea.vmem [#allocation3], 56
    %1017 = vst.msk [vmem:[%s1016] sm:$0xff] %vm37, %v1014
    // Predicated region
    $region18: #{tpu_custom_call.1} parent=1 // pred_check
      _
    $region19: #{tpu_custom_call.1} parent=1 // pred_check_branch
      %1019 = sbr.rel (0) target = $region21
    $region20: #{tpu_custom_call.1} parent=1 // pred_region
      %s1021 = ssub.s32 1024, 1024
      %1022 = vsyncadd [#allocation4], %s1021
      %s1023 = sshll.u32 [#allocation3], 4
      %s1024 = int_to_ptr.vmem [resolvable:$true] %s1023
      %1029 = dma.vmem_to_hbm [thread:$0]  %s1024, 1024, %s4, [#allocation4], 128, 128, 8
    $region21: #{tpu_custom_call.1} parent=1 // pred_fallthru
      _
    // Predicated region
    $region22: #{tpu_custom_call.1} parent=1 // pred_check
      _
    $region23: #{tpu_custom_call.1} parent=1 // pred_check_branch
      %1031 = sbr.rel (0) target = $region25
    $region24: #{tpu_custom_call.1} parent=1 // pred_region
      %1032 = dma.done [#allocation4], 1024
    $region25: #{tpu_custom_call.1} parent=1 // pred_fallthru
      _
    %1033 = vsyncpa [#allocation4], 1

</llo_original>
